<compile_context>
chip_gen: v5e
topology: v5e:2x2
jax: 0.10.0
libtpu: 0.0.40
codegen_flags: <defaults>
</compile_context>

<pallas_src>
import jax
import jax.numpy as jnp
from jax.experimental import pallas as pl
from jax.experimental.pallas import tpu as pltpu


def _mlp_kernel(x_ref, w1_ref, b1_ref, w2_ref, b2_ref, w3_ref, b3_ref, o_ref):
    # x arrives f32 from HBM; cast to bf16 for the MXU in-kernel (free on VPU).
    x = x_ref[...].astype(jnp.bfloat16)                     # (TILE_B, D)

    # Linear 1 + LeakyReLU(0.01)  -- dominant matmul (K = input_size)
    h1 = jnp.dot(x, w1_ref[...], preferred_element_type=jnp.float32) + b1_ref[...]
    h1 = jnp.where(h1 > 0, h1, 0.01 * h1)

    # Linear 2 + LeakyReLU(0.01)
    h2 = jnp.dot(h1.astype(jnp.bfloat16), w2_ref[...],
                 preferred_element_type=jnp.float32) + b2_ref[...]
    h2 = jnp.where(h2 > 0, h2, 0.01 * h2)

    # Linear 3 + Sigmoid (EUP tanh formulation: sigmoid(z) = 0.5*(tanh(z/2)+1))
    logits = jnp.dot(h2.astype(jnp.bfloat16), w3_ref[...],
                     preferred_element_type=jnp.float32) + b3_ref[...]
    o_ref[...] = (0.5 * (jnp.tanh(0.5 * logits) + 1.0)).astype(o_ref.dtype)


def _choose_tile_b(B, D, cls_num, out_bytes, weight_bytes, vmem_limit_bytes):
    """Pick a batch tile: VMEM-bounded, >= 4 grid steps when possible, <= 1024."""
    # Double-buffered f32 x block + double-buffered output block, per batch row.
    bytes_per_row = 2 * D * 4 + 2 * cls_num * out_bytes
    budget = max(1, vmem_limit_bytes - weight_bytes - (4 << 20))  # headroom
    vmem_cap = max(8, budget // bytes_per_row)
    steps_cap = max(8, -(-B // 4))          # aim for >= 4 grid steps (v7x TCs)
    tile_b = min(1024, vmem_cap, steps_cap, B)
    if tile_b >= 8:
        tile_b = (tile_b // 8) * 8          # sublane alignment
    # else: tile_b == B < 8 -> block dim equals full array dim (allowed).
    return tile_b


def classifier_forward(x, params, tile_b=None, vmem_limit_bytes=48 << 20,
                       out_dtype=jnp.bfloat16):
    """x: (B, input_size) float32; params: (w1,b1,w2,b2,w3,b3) float32."""
    w1, b1, w2, b2, w3, b3 = params
    B, D = x.shape
    h1_dim, h2_dim, cls_num = w1.shape[1], w2.shape[1], w3.shape[1]

    # Weights to bf16 for the MXU (tiny, one-time cast); biases stay f32.
    w1_bf = w1.astype(jnp.bfloat16)
    w2_bf = w2.astype(jnp.bfloat16)
    w3_bf = w3.astype(jnp.bfloat16)

    out_bytes = jnp.dtype(out_dtype).itemsize
    weight_flops = D * h1_dim + h1_dim * h2_dim + h2_dim * cls_num
    weight_bytes = weight_flops * 2 + (h1_dim + h2_dim + cls_num) * 4

    if tile_b is None:
        tile_b = _choose_tile_b(B, D, cls_num, out_bytes, weight_bytes,
                                vmem_limit_bytes)
    else:
        tile_b = min(tile_b, B)
        if tile_b >= 8:
            tile_b = max(8, (tile_b // 8) * 8)

    grid = (pl.cdiv(B, tile_b),)            # ragged tail handled by Pallas

    # x / output tiled over batch; weights & biases resident across grid steps.
    x_spec = pl.BlockSpec((tile_b, D), lambda i: (i, 0))
    out_spec = pl.BlockSpec((tile_b, cls_num), lambda i: (i, 0))

    def resident(shape):
        return pl.BlockSpec(shape, lambda i: (0,) * len(shape))

    cost = pl.CostEstimate(
        flops=2 * B * weight_flops,
        transcendentals=B * cls_num,
        bytes_accessed=(B * D * 4                 # x (f32, read once)
                        + weight_bytes            # weights bf16 + biases f32
                        + B * cls_num * out_bytes),
    )

    return pl.pallas_call(
        _mlp_kernel,
        out_shape=jax.ShapeDtypeStruct((B, cls_num), out_dtype),
        grid=grid,
        in_specs=[
            x_spec,
            resident(w1_bf.shape), resident(b1.shape),
            resident(w2_bf.shape), resident(b2.shape),
            resident(w3_bf.shape), resident(b3.shape),
        ],
        out_specs=out_spec,
        compiler_params=pltpu.CompilerParams(
            dimension_semantics=("parallel",),
            vmem_limit_bytes=vmem_limit_bytes),
        cost_estimate=cost,
    )(x, w1_bf, b1, w2_bf, b2, w3_bf, b3)


def init_classifier_params(key, input_size, cls_num):
    """Deterministic init mimicking torch.nn.Linear defaults (U[-1/sqrt(fan_in), +])."""
    dims = [(input_size, 64), (64, 16), (16, cls_num)]
    params = []
    for fan_in, fan_out in dims:
        key, kw, kb = jax.random.split(key, 3)
        bound = 1.0 / (fan_in ** 0.5)
        w = jax.random.uniform(kw, (fan_in, fan_out), jnp.float32, -bound, bound)
        b = jax.random.uniform(kb, (1, fan_out), jnp.float32, -bound, bound)
        params.extend([w, b])
    return tuple(params)


def classifier_reference(x, params):
    """Pure-JAX f32 reference for correctness checking."""
    w1, b1, w2, b2, w3, b3 = params
    h1 = x @ w1 + b1
    h1 = jnp.where(h1 > 0, h1, 0.01 * h1)
    h2 = h1 @ w2 + b2
    h2 = jnp.where(h2 > 0, h2, 0.01 * h2)
    return jax.nn.sigmoid(h2 @ w3 + b3)


if __name__ == "__main__":
    # Small shapes consistent with forward (B, input_size) -> (B, cls_num).
    # B=200 with the auto-derived tile (48) exercises a 5-step batch grid
    # including a ragged (8-row) tail block with no wrapper pad/slice.
    B, INPUT_SIZE, CLS_NUM = 200, 256, 9

    key = jax.random.PRNGKey(0)
    k_x, k_p = jax.random.split(key)
    x = jax.random.normal(k_x, (B, INPUT_SIZE), jnp.float32)
    params = init_classifier_params(k_p, INPUT_SIZE, CLS_NUM)

    out = classifier_forward(x, params)
    out = jax.block_until_ready(out)

    ref = classifier_reference(x, params)
    assert out.shape == (B, CLS_NUM), out.shape
    assert out.dtype == jnp.bfloat16, out.dtype

    out_f32 = out.astype(jnp.float32)
    # bf16 MXU inputs + bf16 output quantization -> post-sigmoid abs error
    # stays well under 2e-2 (callers needing near-f32 probabilities should
    # pass out_dtype=jnp.float32).
    assert jnp.allclose(out_f32, ref, atol=2e-2, rtol=0.0), "mismatch vs reference"
    assert bool(jnp.all((out_f32 >= 0.0) & (out_f32 <= 1.0))), "sigmoid range violated"

    print("KERNEL_OK")
</pallas_src>

<mosaic_0001>
module attributes {stable_mosaic.version = 11 : i64} {
  func.func @_mlp_kernel(%arg0: i32, %arg1: memref<48x256xf32, #tpu.memory_space<vmem>>, %arg2: memref<256x64xbf16, #tpu.memory_space<vmem>>, %arg3: memref<1x64xf32, #tpu.memory_space<vmem>>, %arg4: memref<64x16xbf16, #tpu.memory_space<vmem>>, %arg5: memref<1x16xf32, #tpu.memory_space<vmem>>, %arg6: memref<16x9xbf16, #tpu.memory_space<vmem>>, %arg7: memref<1x9xf32, #tpu.memory_space<vmem>>, %arg8: memref<48x9xbf16, #tpu.memory_space<vmem>>) attributes {dimension_semantics = [#tpu.dimension_semantics<parallel>], iteration_bounds = array<i64: 5>, scalar_prefetch = 0 : i64, scratch_operands = 0 : i64, tpu.core_type = #tpu.core_type<tc>, window_params = [{transform_indices = @transform_0, window_bounds = array<i64: 48, 256>}, {pipeline_mode = #tpu.pipeline_mode<synchronous>, transform_indices = @transform_1, window_bounds = array<i64: 256, 64>}, {pipeline_mode = #tpu.pipeline_mode<synchronous>, transform_indices = @transform_2, window_bounds = array<i64: 1, 64>}, {pipeline_mode = #tpu.pipeline_mode<synchronous>, transform_indices = @transform_3, window_bounds = array<i64: 64, 16>}, {pipeline_mode = #tpu.pipeline_mode<synchronous>, transform_indices = @transform_4, window_bounds = array<i64: 1, 16>}, {pipeline_mode = #tpu.pipeline_mode<synchronous>, transform_indices = @transform_5, window_bounds = array<i64: 16, 9>}, {pipeline_mode = #tpu.pipeline_mode<synchronous>, transform_indices = @transform_6, window_bounds = array<i64: 1, 9>}, {transform_indices = @transform_7, window_bounds = array<i64: 48, 9>}]} {
    %c0 = arith.constant 0 : index
    %c0_0 = arith.constant 0 : index
    %0 = vector.load %arg1[%c0, %c0_0] : memref<48x256xf32, #tpu.memory_space<vmem>>, vector<48x256xf32>
    %1 = arith.truncf %0 : vector<48x256xf32> to vector<48x256xbf16>
    %c0_1 = arith.constant 0 : index
    %c0_2 = arith.constant 0 : index
    %2 = vector.load %arg2[%c0_1, %c0_2] : memref<256x64xbf16, #tpu.memory_space<vmem>>, vector<256x64xbf16>
    %cst = arith.constant dense<0.000000e+00> : vector<48x64xf32>
    %3 = tpu.matmul %1, %2, %cst {dimension_numbers = #tpu.dot_dimension_numbers<[1], [0], [0], [1], [0, 0, 1, 1], [], []>} : vector<48x256xbf16>, vector<256x64xbf16>, vector<48x64xf32> -> vector<48x64xf32>
    %c0_3 = arith.constant 0 : index
    %c0_4 = arith.constant 0 : index
    %4 = vector.load %arg3[%c0_3, %c0_4] : memref<1x64xf32, #tpu.memory_space<vmem>>, vector<1x64xf32>
    %5 = vector.broadcast %4 : vector<1x64xf32> to vector<48x64xf32>
    %6 = arith.addf %3, %5 : vector<48x64xf32>
    %cst_5 = arith.constant 0.000000e+00 : f32
    %7 = vector.broadcast %cst_5 : f32 to vector<48x64xf32>
    %8 = arith.cmpf ogt, %6, %7 : vector<48x64xf32>
    %cst_6 = arith.constant 0.00999999977 : f32
    %9 = vector.broadcast %cst_6 : f32 to vector<48x64xf32>
    %10 = arith.mulf %9, %6 : vector<48x64xf32>
    %11 = arith.select %8, %6, %10 : vector<48x64xi1>, vector<48x64xf32>
    %12 = arith.truncf %11 : vector<48x64xf32> to vector<48x64xbf16>
    %c0_7 = arith.constant 0 : index
    %c0_8 = arith.constant 0 : index
    %13 = vector.load %arg4[%c0_7, %c0_8] : memref<64x16xbf16, #tpu.memory_space<vmem>>, vector<64x16xbf16>
    %cst_9 = arith.constant dense<0.000000e+00> : vector<48x16xf32>
    %14 = tpu.matmul %12, %13, %cst_9 {dimension_numbers = #tpu.dot_dimension_numbers<[1], [0], [0], [1], [0, 0, 1, 1], [], []>} : vector<48x64xbf16>, vector<64x16xbf16>, vector<48x16xf32> -> vector<48x16xf32>
    %c0_10 = arith.constant 0 : index
    %c0_11 = arith.constant 0 : index
    %15 = vector.load %arg5[%c0_10, %c0_11] : memref<1x16xf32, #tpu.memory_space<vmem>>, vector<1x16xf32>
    %16 = vector.broadcast %15 : vector<1x16xf32> to vector<48x16xf32>
    %17 = arith.addf %14, %16 : vector<48x16xf32>
    %cst_12 = arith.constant 0.000000e+00 : f32
    %18 = vector.broadcast %cst_12 : f32 to vector<48x16xf32>
    %19 = arith.cmpf ogt, %17, %18 : vector<48x16xf32>
    %cst_13 = arith.constant 0.00999999977 : f32
    %20 = vector.broadcast %cst_13 : f32 to vector<48x16xf32>
    %21 = arith.mulf %20, %17 : vector<48x16xf32>
    %22 = arith.select %19, %17, %21 : vector<48x16xi1>, vector<48x16xf32>
    %23 = arith.truncf %22 : vector<48x16xf32> to vector<48x16xbf16>
    %c0_14 = arith.constant 0 : index
    %c0_15 = arith.constant 0 : index
    %24 = vector.load %arg6[%c0_14, %c0_15] : memref<16x9xbf16, #tpu.memory_space<vmem>>, vector<16x9xbf16>
    %cst_16 = arith.constant dense<0.000000e+00> : vector<48x9xf32>
    %25 = tpu.matmul %23, %24, %cst_16 {dimension_numbers = #tpu.dot_dimension_numbers<[1], [0], [0], [1], [0, 0, 1, 1], [], []>} : vector<48x16xbf16>, vector<16x9xbf16>, vector<48x9xf32> -> vector<48x9xf32>
    %c0_17 = arith.constant 0 : index
    %c0_18 = arith.constant 0 : index
    %26 = vector.load %arg7[%c0_17, %c0_18] : memref<1x9xf32, #tpu.memory_space<vmem>>, vector<1x9xf32>
    %27 = vector.broadcast %26 : vector<1x9xf32> to vector<48x9xf32>
    %28 = arith.addf %25, %27 : vector<48x9xf32>
    %cst_19 = arith.constant 5.000000e-01 : f32
    %29 = vector.broadcast %cst_19 : f32 to vector<48x9xf32>
    %30 = arith.mulf %29, %28 : vector<48x9xf32>
    %31 = math.tanh %30 : vector<48x9xf32>
    %cst_20 = arith.constant 1.000000e+00 : f32
    %32 = vector.broadcast %cst_20 : f32 to vector<48x9xf32>
    %33 = arith.addf %31, %32 : vector<48x9xf32>
    %cst_21 = arith.constant 5.000000e-01 : f32
    %34 = vector.broadcast %cst_21 : f32 to vector<48x9xf32>
    %35 = arith.mulf %34, %33 : vector<48x9xf32>
    %36 = arith.truncf %35 : vector<48x9xf32> to vector<48x9xbf16>
    %c0_22 = arith.constant 0 : index
    %c0_23 = arith.constant 0 : index
    %37 = vector.load %arg8[%c0_22, %c0_23] : memref<48x9xbf16, #tpu.memory_space<vmem>>, vector<48x9xbf16>
    tpu.vector_store %arg8[%c0_22, %c0_23], %36 {strides = array<i32>} : memref<48x9xbf16, #tpu.memory_space<vmem>>, vector<48x9xbf16>,
    return
  }
  func.func @transform_0(%arg0: i32) -> (i32, i32) {
    %c0_i32 = arith.constant 0 : i32
    %c0_i32_0 = arith.constant 0 : i32
    return %arg0, %c0_i32 : i32, i32
  }
  func.func @transform_1(%arg0: i32) -> (i32, i32) {
    %c0_i32 = arith.constant 0 : i32
    %c0_i32_0 = arith.constant 0 : i32
    %c0_i32_1 = arith.constant 0 : i32
    return %c0_i32, %c0_i32_0 : i32, i32
  }
  func.func @transform_2(%arg0: i32) -> (i32, i32) {
    %c0_i32 = arith.constant 0 : i32
    %c0_i32_0 = arith.constant 0 : i32
    %c0_i32_1 = arith.constant 0 : i32
    return %c0_i32, %c0_i32_0 : i32, i32
  }
  func.func @transform_3(%arg0: i32) -> (i32, i32) {
    %c0_i32 = arith.constant 0 : i32
    %c0_i32_0 = arith.constant 0 : i32
    %c0_i32_1 = arith.constant 0 : i32
    return %c0_i32, %c0_i32_0 : i32, i32
  }
  func.func @transform_4(%arg0: i32) -> (i32, i32) {
    %c0_i32 = arith.constant 0 : i32
    %c0_i32_0 = arith.constant 0 : i32
    %c0_i32_1 = arith.constant 0 : i32
    return %c0_i32, %c0_i32_0 : i32, i32
  }
  func.func @transform_5(%arg0: i32) -> (i32, i32) {
    %c0_i32 = arith.constant 0 : i32
    %c0_i32_0 = arith.constant 0 : i32
    %c0_i32_1 = arith.constant 0 : i32
    return %c0_i32, %c0_i32_0 : i32, i32
  }
  func.func @transform_6(%arg0: i32) -> (i32, i32) {
    %c0_i32 = arith.constant 0 : i32
    %c0_i32_0 = arith.constant 0 : i32
    %c0_i32_1 = arith.constant 0 : i32
    return %c0_i32, %c0_i32_0 : i32, i32
  }
  func.func @transform_7(%arg0: i32) -> (i32, i32) {
    %c0_i32 = arith.constant 0 : i32
    %c0_i32_0 = arith.constant 0 : i32
    return %arg0, %c0_i32 : i32, i32
  }
}

</mosaic_0001>

<llo_original>
// kernel: tpu_custom_call.1
$region0: #{tpu_custom_call.1}
  #allocation0 [shape = 'u32[]', space=smem, size = 0x4, offset = 0x4, fixed_abs, tag = 'smem constant byte address 0x4 - core index']
  #allocation1 [shape = 'u32[72,128]{1,0:T(1,128)}', space=vmem, size = 0x9000, scoped, tag = 'internal scratch']
  %s0 = inlined_call_operand.hbm [shape: f32[200,256], index: 0, kind: input, shape index: {}]
  %s1 = inlined_call_operand.vmem [shape: bf16[256,64], index: 1, kind: input, shape index: {}]
  %s2 = inlined_call_operand.vmem [shape: f32[1,64], index: 2, kind: input, shape index: {}]
  %s3 = inlined_call_operand.vmem [shape: bf16[64,16], index: 3, kind: input, shape index: {}]
  %s4 = inlined_call_operand.vmem [shape: f32[1,16], index: 4, kind: input, shape index: {}]
  %s5 = inlined_call_operand.vmem [shape: bf16[16,9], index: 5, kind: input, shape index: {}]
  %s6 = inlined_call_operand.vmem [shape: f32[1,9], index: 6, kind: input, shape index: {}]
  %s7 = inlined_call_operand.vmem [shape: bf16[200,9], index: 7, kind: output, shape index: {}]
  %s8 = sld [smem:[#allocation0]]
  $region109: #{tpu_custom_call.1} parent=0
    _
  %s10 = ssub.s32 1, %s8
  %s11 = scalar_select 0, %s10, %s8
  $region1: #{tpu_custom_call.1} parent=0
    #allocation2 [shape = 'u8[98304]{0}', space=vmem, size = 0x18000, scoped, tag = 'input window, operand 0']
    #allocation3 [shape = 's32[2]{0}', space=sflag, size = 0x8, scoped, tag = 'scoped memory for tpu_custom_call.1']
    #allocation4 [shape = 'u8[24576]{0}', space=vmem, size = 0x6000, scoped, tag = 'output window, operand 0']
    %12 = vsyncpa [#allocation3], 0
    %s13 = scalar_lea.sflag [#allocation3], 1
    %14 = vsyncpa %s13, 0
    loop: start=0, step=1, limit=7
    $region2: #{tpu_custom_call.1} parent=1 // loop_pre_header
      _
    $region3: #{tpu_custom_call.1} parent=1 // loop_header
      %s16 = sphi 0, %s20
      %p17 = scmp.ge.s32.totalorder %s16, 7
      %s26 = sphi 0, %s28
      %s29 = sphi 0, %s26
      %s30 = sphi 0, %s29
      %s46 = sphi 0, %s30
      %s50 = sphi 0, %s50
      %s52 = sphi 0, %s50
      %s53 = sphi 0, %s52
      %s67 = sphi 0, %s53
      %s71 = sphi 0, %s71
      %s73 = sphi 0, %s71
      %s74 = sphi 0, %s73
      %s88 = sphi 0, %s74
      %s92 = sphi 0, %s92
      %s94 = sphi 0, %s92
      %s95 = sphi 0, %s94
      %s109 = sphi 0, %s95
      %s113 = sphi 0, %s113
      %s115 = sphi 0, %s113
      %s116 = sphi 0, %s115
      %s130 = sphi 0, %s116
      %s134 = sphi 0, %s134
      %s136 = sphi 0, %s134
      %s137 = sphi 0, %s136
      %s151 = sphi 0, %s137
      %s155 = sphi 0, %s155
      %s157 = sphi 0, %s155
      %s158 = sphi 0, %s157
      %s172 = sphi 0, %s158
      %s178 = sphi 0, %s180
      %s181 = sphi 0, %s178
      %s182 = sphi 0, %s181
      %s198 = sphi 0, %s182
    $region4: #{tpu_custom_call.1} parent=1 // loop_header_branch
      %19 = sbr.rel (%p17) target = $region8
    $region5: #{tpu_custom_call.1} parent=1 // loop_body
      %s21 = ssub.s32 %s16, 1
      %s22 = ssub.s32 %s16, 2
      %s23 = sadd.s32 %s16, 1
      %s24 = ssub.s32 %s16, %s23
      %p25 = scmp.eq.s32.totalorder %s24, 0
      %s27 = sadd.s32 %s26, 1
      %s28 = scalar_select %p25, %s26, %s27
      %p31 = pneg %p25
      %p32 = scmp.eq.s32.totalorder %s16, 4
      %p33 = por %p31, %p32
      %p34 = scmp.ne.s32.totalorder %s26, %s29
      %p35 = scmp.eq.s32.totalorder %s16, 0
      %p36 = por %p34, %p35
      %p37 = scmp.ne.s32.totalorder %s26, %s29
      %p38 = scmp.eq.s32.totalorder %s21, 4
      %p39 = por %p37, %p38
      %p40 = scmp.ne.s32.totalorder %s29, %s30
      %p41 = scmp.eq.s32.totalorder %s21, 0
      %p42 = por %p40, %p41
      %p43 = scmp.ne.s32.totalorder %s29, %s30
      %p44 = scmp.eq.s32.totalorder %s22, 4
      %p45 = por %p43, %p44
      %p47 = scmp.ne.s32.totalorder %s30, %s46
      %p48 = scmp.eq.s32.totalorder %s22, 0
      %p49 = por %p47, %p48
      %s51 = sadd.s32 %s50, 1
      %p54 = scmp.eq.s32.totalorder %s16, 4
      %p55 = scmp.ne.s32.totalorder %s50, %s52
      %p56 = scmp.eq.s32.totalorder %s16, 0
      %p57 = por %p55, %p56
      %p58 = scmp.ne.s32.totalorder %s50, %s52
      %p59 = scmp.eq.s32.totalorder %s21, 4
      %p60 = por %p58, %p59
      %p61 = scmp.ne.s32.totalorder %s52, %s53
      %p62 = scmp.eq.s32.totalorder %s21, 0
      %p63 = por %p61, %p62
      %p64 = scmp.ne.s32.totalorder %s52, %s53
      %p65 = scmp.eq.s32.totalorder %s22, 4
      %p66 = por %p64, %p65
      %p68 = scmp.ne.s32.totalorder %s53, %s67
      %p69 = scmp.eq.s32.totalorder %s22, 0
      %p70 = por %p68, %p69
      %s72 = sadd.s32 %s71, 1
      %p75 = scmp.eq.s32.totalorder %s16, 4
      %p76 = scmp.ne.s32.totalorder %s71, %s73
      %p77 = scmp.eq.s32.totalorder %s16, 0
      %p78 = por %p76, %p77
      %p79 = scmp.ne.s32.totalorder %s71, %s73
      %p80 = scmp.eq.s32.totalorder %s21, 4
      %p81 = por %p79, %p80
      %p82 = scmp.ne.s32.totalorder %s73, %s74
      %p83 = scmp.eq.s32.totalorder %s21, 0
      %p84 = por %p82, %p83
      %p85 = scmp.ne.s32.totalorder %s73, %s74
      %p86 = scmp.eq.s32.totalorder %s22, 4
      %p87 = por %p85, %p86
      %p89 = scmp.ne.s32.totalorder %s74, %s88
      %p90 = scmp.eq.s32.totalorder %s22, 0
      %p91 = por %p89, %p90
      %s93 = sadd.s32 %s92, 1
      %p96 = scmp.eq.s32.totalorder %s16, 4
      %p97 = scmp.ne.s32.totalorder %s92, %s94
      %p98 = scmp.eq.s32.totalorder %s16, 0
      %p99 = por %p97, %p98
      %p100 = scmp.ne.s32.totalorder %s92, %s94
      %p101 = scmp.eq.s32.totalorder %s21, 4
      %p102 = por %p100, %p101
      %p103 = scmp.ne.s32.totalorder %s94, %s95
      %p104 = scmp.eq.s32.totalorder %s21, 0
      %p105 = por %p103, %p104
      %p106 = scmp.ne.s32.totalorder %s94, %s95
      %p107 = scmp.eq.s32.totalorder %s22, 4
      %p108 = por %p106, %p107
      %p110 = scmp.ne.s32.totalorder %s95, %s109
      %p111 = scmp.eq.s32.totalorder %s22, 0
      %p112 = por %p110, %p111
      %s114 = sadd.s32 %s113, 1
      %p117 = scmp.eq.s32.totalorder %s16, 4
      %p118 = scmp.ne.s32.totalorder %s113, %s115
      %p119 = scmp.eq.s32.totalorder %s16, 0
      %p120 = por %p118, %p119
      %p121 = scmp.ne.s32.totalorder %s113, %s115
      %p122 = scmp.eq.s32.totalorder %s21, 4
      %p123 = por %p121, %p122
      %p124 = scmp.ne.s32.totalorder %s115, %s116
      %p125 = scmp.eq.s32.totalorder %s21, 0
      %p126 = por %p124, %p125
      %p127 = scmp.ne.s32.totalorder %s115, %s116
      %p128 = scmp.eq.s32.totalorder %s22, 4
      %p129 = por %p127, %p128
      %p131 = scmp.ne.s32.totalorder %s116, %s130
      %p132 = scmp.eq.s32.totalorder %s22, 0
      %p133 = por %p131, %p132
      %s135 = sadd.s32 %s134, 1
      %p138 = scmp.eq.s32.totalorder %s16, 4
      %p139 = scmp.ne.s32.totalorder %s134, %s136
      %p140 = scmp.eq.s32.totalorder %s16, 0
      %p141 = por %p139, %p140
      %p142 = scmp.ne.s32.totalorder %s134, %s136
      %p143 = scmp.eq.s32.totalorder %s21, 4
      %p144 = por %p142, %p143
      %p145 = scmp.ne.s32.totalorder %s136, %s137
      %p146 = scmp.eq.s32.totalorder %s21, 0
      %p147 = por %p145, %p146
      %p148 = scmp.ne.s32.totalorder %s136, %s137
      %p149 = scmp.eq.s32.totalorder %s22, 4
      %p150 = por %p148, %p149
      %p152 = scmp.ne.s32.totalorder %s137, %s151
      %p153 = scmp.eq.s32.totalorder %s22, 0
      %p154 = por %p152, %p153
      %s156 = sadd.s32 %s155, 1
      %p159 = scmp.eq.s32.totalorder %s16, 4
      %p160 = scmp.ne.s32.totalorder %s155, %s157
      %p161 = scmp.eq.s32.totalorder %s16, 0
      %p162 = por %p160, %p161
      %p163 = scmp.ne.s32.totalorder %s155, %s157
      %p164 = scmp.eq.s32.totalorder %s21, 4
      %p165 = por %p163, %p164
      %p166 = scmp.ne.s32.totalorder %s157, %s158
      %p167 = scmp.eq.s32.totalorder %s21, 0
      %p168 = por %p166, %p167
      %p169 = scmp.ne.s32.totalorder %s157, %s158
      %p170 = scmp.eq.s32.totalorder %s22, 4
      %p171 = por %p169, %p170
      %p173 = scmp.ne.s32.totalorder %s158, %s172
      %p174 = scmp.eq.s32.totalorder %s22, 0
      %p175 = por %p173, %p174
      %s176 = ssub.s32 %s16, %s23
      %p177 = scmp.eq.s32.totalorder %s176, 0
      %s179 = sadd.s32 %s178, 1
      %s180 = scalar_select %p177, %s178, %s179
      %p183 = pneg %p177
      %p184 = scmp.eq.s32.totalorder %s16, 4
      %p185 = por %p183, %p184
      %p186 = scmp.ne.s32.totalorder %s178, %s181
      %p187 = scmp.eq.s32.totalorder %s16, 0
      %p188 = por %p186, %p187
      %p189 = scmp.ne.s32.totalorder %s178, %s181
      %p190 = scmp.eq.s32.totalorder %s21, 4
      %p191 = por %p189, %p190
      %p192 = scmp.ne.s32.totalorder %s181, %s182
      %p193 = scmp.eq.s32.totalorder %s21, 0
      %p194 = por %p192, %p193
      %p195 = scmp.ne.s32.totalorder %s181, %s182
      %p196 = scmp.eq.s32.totalorder %s22, 4
      %p197 = por %p195, %p196
      %p199 = scmp.ne.s32.totalorder %s182, %s198
      %p200 = scmp.eq.s32.totalorder %s22, 0
      %p201 = por %p199, %p200
      %p202 = scmp.le.s32.totalorder 1, %s16
      %p203 = scmp.lt.s32.totalorder %s16, 6
      %p204 = pnand %p202, %p203
      %p205 = pneg %p204
      // Predicated region
      $region9: #{tpu_custom_call.1} parent=5 // pred_check
        _
      $region10: #{tpu_custom_call.1} parent=5 // pred_check_branch
        %207 = sbr.rel (%p204) target = $region12
      $region11: #{tpu_custom_call.1} parent=5 // pred_region
        %s208 = ssub.s32 %s16, 1
        // Predicated region
        $region13: #{tpu_custom_call.1} parent=11 // pred_check
          %p209 = pneg %p63
        $region14: #{tpu_custom_call.1} parent=11 // pred_check_branch
          %211 = sbr.rel (%p209) target = $region16
        $region15: #{tpu_custom_call.1} parent=11 // pred_region
          _
        $region16: #{tpu_custom_call.1} parent=11 // pred_fallthru
          _
        // Predicated region
        $region17: #{tpu_custom_call.1} parent=11 // pred_check
          %p212 = pneg %p84
        $region18: #{tpu_custom_call.1} parent=11 // pred_check_branch
          %214 = sbr.rel (%p212) target = $region20
        $region19: #{tpu_custom_call.1} parent=11 // pred_region
          _
        $region20: #{tpu_custom_call.1} parent=11 // pred_fallthru
          _
        // Predicated region
        $region21: #{tpu_custom_call.1} parent=11 // pred_check
          %p215 = pneg %p105
        $region22: #{tpu_custom_call.1} parent=11 // pred_check_branch
          %217 = sbr.rel (%p215) target = $region24
        $region23: #{tpu_custom_call.1} parent=11 // pred_region
          _
        $region24: #{tpu_custom_call.1} parent=11 // pred_fallthru
          _
        // Predicated region
        $region25: #{tpu_custom_call.1} parent=11 // pred_check
          %p218 = pneg %p126
        $region26: #{tpu_custom_call.1} parent=11 // pred_check_branch
          %220 = sbr.rel (%p218) target = $region28
        $region27: #{tpu_custom_call.1} parent=11 // pred_region
          _
        $region28: #{tpu_custom_call.1} parent=11 // pred_fallthru
          _
        // Predicated region
        $region29: #{tpu_custom_call.1} parent=11 // pred_check
          %p221 = pneg %p147
        $region30: #{tpu_custom_call.1} parent=11 // pred_check_branch
          %223 = sbr.rel (%p221) target = $region32
        $region31: #{tpu_custom_call.1} parent=11 // pred_region
          _
        $region32: #{tpu_custom_call.1} parent=11 // pred_fallthru
          _
        // Predicated region
        $region33: #{tpu_custom_call.1} parent=11 // pred_check
          %p224 = pneg %p168
        $region34: #{tpu_custom_call.1} parent=11 // pred_check_branch
          %226 = sbr.rel (%p224) target = $region36
        $region35: #{tpu_custom_call.1} parent=11 // pred_region
          _
        $region36: #{tpu_custom_call.1} parent=11 // pred_fallthru
          _
      $region12: #{tpu_custom_call.1} parent=5 // pred_fallthru
        _
      %p227 = scmp.lt.s32.totalorder %s16, 5
      // Predicated region
      $region37: #{tpu_custom_call.1} parent=5 // pred_check
        %p228 = pneg %p227
      $region38: #{tpu_custom_call.1} parent=5 // pred_check_branch
        %230 = sbr.rel (%p228) target = $region40
      $region39: #{tpu_custom_call.1} parent=5 // pred_region
        // Predicated region
        $region41: #{tpu_custom_call.1} parent=39 // pred_check
          %p231 = pneg %p36
        $region42: #{tpu_custom_call.1} parent=39 // pred_check_branch
          %233 = sbr.rel (%p231) target = $region44
        $region43: #{tpu_custom_call.1} parent=39 // pred_region
          %s234 = sand.u32 %s26, 1
          %s235 = scalar_lea.sflag [#allocation3], %s234
          %s236 = sand.u32 %s26, 1
          %s237 = smul.addr %s236, 96
          %s238 = scalar_lea.vmem [#allocation2], %s237
          %s239 = smul.u32 6, %s16
          %s240 = ssub.s32 25, %s239
          %p241 = scmp.lt.s32.totalorder %s240, 6
          %s242 = scalar_select %p241, %s240, 6
          %s243 = smul.u32 8, %s242
          %s244 = smul.u32 %s243, 2
          %s245 = ssub.s32 96, %s244
          %s246 = sshll.u32 %s245, 4
          %247 = vsyncadd %s235, %s246
          %p248 = scmp.ne.s32.totalorder 0, %s244
          %s249 = smul.addr %s239, 2
          %s250 = smul.addr %s249, 8
          %s251 = scalar_lea.hbm %s0, %s250
          %s252 = smul.u32 16, %s242
          %s253 = sshll.u32 %s251, 4
          %s254 = int_to_ptr.hbm [resolvable:$true] %s253
          %s255 = sshll.u32 %s238, 4
          %s256 = int_to_ptr.vmem [resolvable:$true] %s255
          %s257 = sshll.u32 %s252, 4
          %261 = dma.hbm_to_vmem [thread:$0]  (%p248), %s254, %s257, %s256, %s235, 256, 256, 16
        $region44: #{tpu_custom_call.1} parent=39 // pred_fallthru
          _
      $region40: #{tpu_custom_call.1} parent=5 // pred_fallthru
        _
      %p262 = scmp.le.s32.totalorder 1, %s16
      %p263 = scmp.lt.s32.totalorder %s16, 6
      %p264 = pnand %p262, %p263
      %p265 = pneg %p264
      // Predicated region
      $region45: #{tpu_custom_call.1} parent=5 // pred_check
        _
      $region46: #{tpu_custom_call.1} parent=5 // pred_check_branch
        %267 = sbr.rel (%p264) target = $region48
      $region47: #{tpu_custom_call.1} parent=5 // pred_region
        %s268 = ssub.s32 %s16, 1
        %s269 = sand.u32 %s29, 1
        %s270 = scalar_lea.sflag [#allocation3], %s269
        %s271 = sand.u32 %s29, 1
        %s272 = smul.addr %s271, 96
        %s273 = scalar_lea.vmem [#allocation2], %s272
        // Predicated region
        $region49: #{tpu_custom_call.1} parent=47 // pred_check
          %p274 = pneg %p42
        $region50: #{tpu_custom_call.1} parent=47 // pred_check_branch
          %276 = sbr.rel (%p274) target = $region52
        $region51: #{tpu_custom_call.1} parent=47 // pred_region
          %278 = dma.done %s270, 1536
        $region52: #{tpu_custom_call.1} parent=47 // pred_fallthru
          _
        %s279 = sand.u32 %s29, 1
        %s280 = scalar_lea.sflag [#allocation3], %s279
        %s281 = sand.u32 %s29, 1
        %s282 = smul.addr %s281, 96
        %s283 = scalar_lea.vmem [#allocation2], %s282
        %p284 = pneg %p42
        %p285 = pneg %p39
        %p286 = pneg %p63
        %p287 = pneg %p60
        %p288 = pneg %p84
        %p289 = pneg %p81
        %p290 = pneg %p105
        %p291 = pneg %p102
        %p292 = pneg %p126
        %p293 = pneg %p123
        %p294 = pneg %p147
        %p295 = pneg %p144
        %p296 = pneg %p168
        %p297 = pneg %p165
        %p298 = pneg %p194
        %p299 = pneg %p191
        %s300 = sand.u32 %s181, 1
        %s301 = sand.u32 %s181, 1
        %s302 = smul.addr %s301, 24
        %s303 = scalar_lea.vmem [#allocation4], %s302
        %s304 = smul.u32 6, %s21
        %s305 = ssub.s32 25, %s304
        %p306 = scmp.lt.s32.totalorder %s305, 6
        %s307 = scalar_select %p306, %s305, 6
        %s308 = smul.u32 8, %s307
        %s309 = smul.u32 %s308, 2
        %s310 = smul.u32 6, %s21
        %s311 = ssub.s32 25, %s310
        %p312 = scmp.lt.s32.totalorder %s311, 6
        %s313 = scalar_select %p312, %s311, 6
        %s314 = smul.u32 4, %s313
        %v316 = vld [vmem:[%s273] sm:$0xff]
        %v317 = vld [vmem:[%s273 + $0x8] sm:$0xff]
        %v318 = vld [vmem:[%s273 + $0x10] sm:$0xff]
        %v319 = vld [vmem:[%s273 + $0x18] sm:$0xff]
        %v320 = vld [vmem:[%s273 + $0x20] sm:$0xff]
        %v321 = vld [vmem:[%s273 + $0x28] sm:$0xff]
        %v322 = vld [vmem:[%s273 + $0x30] sm:$0xff]
        %v323 = vld [vmem:[%s273 + $0x38] sm:$0xff]
        %v324 = vld [vmem:[%s273 + $0x40] sm:$0xff]
        %v325 = vld [vmem:[%s273 + $0x48] sm:$0xff]
        %v326 = vld [vmem:[%s273 + $0x50] sm:$0xff]
        %v327 = vld [vmem:[%s273 + $0x58] sm:$0xff]
        %v328 = vpack.c.bf16 %v318, %v316
        %v329 = vpack.c.bf16 %v319, %v317
        %v330 = vpack.c.bf16 %v322, %v320
        %v331 = vpack.c.bf16 %v323, %v321
        %v332 = vpack.c.bf16 %v326, %v324
        %v333 = vpack.c.bf16 %v327, %v325
        %v334 = vld [vmem:[%s1] sm:$0xf]
        %v335 = vld [vmem:[%s1 + $0x4] sm:$0xf]
        %v336 = vld [vmem:[%s1 + $0x8] sm:$0xf]
        %v337 = vld [vmem:[%s1 + $0xc] sm:$0xf]
        %v338 = vld [vmem:[%s1 + $0x10] sm:$0xf]
        %v339 = vld [vmem:[%s1 + $0x14] sm:$0xf]
        %v340 = vld [vmem:[%s1 + $0x18] sm:$0xf]
        %v341 = vld [vmem:[%s1 + $0x1c] sm:$0xf]
        %v342 = vld [vmem:[%s1 + $0x20] sm:$0xf]
        %v343 = vld [vmem:[%s1 + $0x24] sm:$0xf]
        %v344 = vld [vmem:[%s1 + $0x28] sm:$0xf]
        %v345 = vld [vmem:[%s1 + $0x2c] sm:$0xf]
        %v346 = vld [vmem:[%s1 + $0x30] sm:$0xf]
        %v347 = vld [vmem:[%s1 + $0x34] sm:$0xf]
        %v348 = vld [vmem:[%s1 + $0x38] sm:$0xf]
        %v349 = vld [vmem:[%s1 + $0x3c] sm:$0xf]
        %v350 = vld [vmem:[%s1 + $0x40] sm:$0xf]
        %v351 = vld [vmem:[%s1 + $0x44] sm:$0xf]
        %v352 = vld [vmem:[%s1 + $0x48] sm:$0xf]
        %v353 = vld [vmem:[%s1 + $0x4c] sm:$0xf]
        %v354 = vld [vmem:[%s1 + $0x50] sm:$0xf]
        %v355 = vld [vmem:[%s1 + $0x54] sm:$0xf]
        %v356 = vld [vmem:[%s1 + $0x58] sm:$0xf]
        %v357 = vld [vmem:[%s1 + $0x5c] sm:$0xf]
        %v358 = vld [vmem:[%s1 + $0x60] sm:$0xf]
        %v359 = vld [vmem:[%s1 + $0x64] sm:$0xf]
        %v360 = vld [vmem:[%s1 + $0x68] sm:$0xf]
        %v361 = vld [vmem:[%s1 + $0x6c] sm:$0xf]
        %v362 = vld [vmem:[%s1 + $0x70] sm:$0xf]
        %v363 = vld [vmem:[%s1 + $0x74] sm:$0xf]
        %v364 = vld [vmem:[%s1 + $0x78] sm:$0xf]
        %v365 = vld [vmem:[%s1 + $0x7c] sm:$0xf]
        %v366 = vld [vmem:[%s2] sm:$0x1]
        %v368 = vperm.slane %v366, 0
        %v402 = vunpack.c.l.b16 %v334
        %v403 = vunpack.c.l.b16 %v335
        %v404 = vunpack.c.l.b16 %v336
        %v405 = vunpack.c.l.b16 %v337
        %v406 = vunpack.c.l.b16 %v338
        %v407 = vunpack.c.l.b16 %v339
        %v408 = vunpack.c.l.b16 %v340
        %v409 = vunpack.c.l.b16 %v341
        %v410 = vunpack.c.l.b16 %v342
        %v411 = vunpack.c.l.b16 %v343
        %v412 = vunpack.c.l.b16 %v344
        %v413 = vunpack.c.l.b16 %v345
        %v414 = vunpack.c.l.b16 %v346
        %v415 = vunpack.c.l.b16 %v347
        %v416 = vunpack.c.l.b16 %v348
        %v417 = vunpack.c.l.b16 %v349
        %v418 = vunpack.c.l.b16 %v350
        %v419 = vunpack.c.l.b16 %v351
        %v420 = vunpack.c.l.b16 %v352
        %v421 = vunpack.c.l.b16 %v353
        %v422 = vunpack.c.l.b16 %v354
        %v423 = vunpack.c.l.b16 %v355
        %v424 = vunpack.c.l.b16 %v356
        %v425 = vunpack.c.l.b16 %v357
        %v426 = vunpack.c.l.b16 %v358
        %v427 = vunpack.c.l.b16 %v359
        %v428 = vunpack.c.l.b16 %v360
        %v429 = vunpack.c.l.b16 %v361
        %v430 = vunpack.c.l.b16 %v362
        %v431 = vunpack.c.l.b16 %v363
        %v432 = vunpack.c.l.b16 %v364
        %v433 = vunpack.c.l.b16 %v365
        %v434 = vpack.c.b16 %v403, %v402
        %v435 = vpack.c.b16 %v405, %v404
        %v436 = vpack.c.b16 %v407, %v406
        %v437 = vpack.c.b16 %v409, %v408
        %v438 = vpack.c.b16 %v411, %v410
        %v439 = vpack.c.b16 %v413, %v412
        %v440 = vpack.c.b16 %v415, %v414
        %v441 = vpack.c.b16 %v417, %v416
        %v442 = vpack.c.b16 %v419, %v418
        %v443 = vpack.c.b16 %v421, %v420
        %v444 = vpack.c.b16 %v423, %v422
        %v445 = vpack.c.b16 %v425, %v424
        %v446 = vpack.c.b16 %v427, %v426
        %v447 = vpack.c.b16 %v429, %v428
        %v448 = vpack.c.b16 %v431, %v430
        %v449 = vpack.c.b16 %v433, %v432
        %466 = vmatpush.bf16.msra.mxu0 %v441
        %467 = vmatpush.bf16.msra.mxu0 %v440
        %468 = vmatpush.bf16.msra.mxu0 %v439
        %469 = vmatpush.bf16.msra.mxu0 %v438
        %470 = vmatpush.bf16.msra.mxu0 %v437
        %471 = vmatpush.bf16.msra.mxu0 %v436
        %472 = vmatpush.bf16.msra.mxu0 %v435
        %473 = vmatpush.bf16.msra.mxu0 %v434
        %474 = vmatmul.bf16.gmra.mxu0 %v328
        %v475 = vpop.f32.mrf.mxu0
        %v476 = vadd.f32 %v368, %v475
        %v477 = vpop.f32.mrf.mxu0
        %v478 = vadd.f32 %v368, %v477
        %479 = vmatmul.bf16.gmra.mxu0 %v330
        %v480 = vpop.f32.mrf.mxu0
        %v481 = vadd.f32 %v368, %v480
        %v482 = vpop.f32.mrf.mxu0
        %v483 = vadd.f32 %v368, %v482
        %484 = vmatmul.bf16.gmra.mxu0 %v332
        %v485 = vpop.f32.mrf.mxu0
        %v486 = vadd.f32 %v368, %v485
        %v487 = vpop.f32.mrf.mxu0
        %v488 = vadd.f32 %v368, %v487
        %489 = vdwg.mxu0
        %490 = vmatpush.bf16.msra.mxu0 %v449
        %491 = vmatpush.bf16.msra.mxu0 %v448
        %492 = vmatpush.bf16.msra.mxu0 %v447
        %493 = vmatpush.bf16.msra.mxu0 %v446
        %494 = vmatpush.bf16.msra.mxu0 %v445
        %495 = vmatpush.bf16.msra.mxu0 %v444
        %496 = vmatpush.bf16.msra.mxu0 %v443
        %497 = vmatpush.bf16.msra.mxu0 %v442
        %498 = vmatmul.bf16.gmra.mxu0 %v329
        %v499 = vpop.f32.mrf.mxu0
        %v500 = vadd.f32 %v476, %v499
        %v501 = vpop.f32.mrf.mxu0
        %v502 = vadd.f32 %v478, %v501
        %503 = vmatmul.bf16.gmra.mxu0 %v331
        %v504 = vpop.f32.mrf.mxu0
        %v505 = vadd.f32 %v481, %v504
        %v506 = vpop.f32.mrf.mxu0
        %v507 = vadd.f32 %v483, %v506
        %508 = vmatmul.bf16.gmra.mxu0 %v333
        %v509 = vpop.f32.mrf.mxu0
        %v510 = vadd.f32 %v486, %v509
        %v511 = vpop.f32.mrf.mxu0
        %v512 = vadd.f32 %v488, %v511
        %513 = vdwg.mxu0
        %vm514 = vcmp.gt.f32.partialorder %v500, 0.0
        %vm515 = vcmp.gt.f32.partialorder %v502, 0.0
        %vm516 = vcmp.gt.f32.partialorder %v505, 0.0
        %vm517 = vcmp.gt.f32.partialorder %v507, 0.0
        %vm518 = vcmp.gt.f32.partialorder %v510, 0.0
        %vm519 = vcmp.gt.f32.partialorder %v512, 0.0
        %v520 = vmul.f32 %v500, 0.01
        %v521 = vmul.f32 %v502, 0.01
        %v522 = vmul.f32 %v505, 0.01
        %v523 = vmul.f32 %v507, 0.01
        %v524 = vmul.f32 %v510, 0.01
        %v525 = vmul.f32 %v512, 0.01
        %v526 = vsel %vm514, %v500, %v520
        %v527 = vsel %vm515, %v502, %v521
        %v528 = vsel %vm516, %v505, %v522
        %v529 = vsel %vm517, %v507, %v523
        %v530 = vsel %vm518, %v510, %v524
        %v531 = vsel %vm519, %v512, %v525
        %v532 = vpack.c.bf16 %v527, %v526
        %v533 = vpack.c.bf16 %v529, %v528
        %v534 = vpack.c.bf16 %v531, %v530
        %v535 = vld [vmem:[%s3] sm:$0xf]
        %v536 = vld [vmem:[%s3 + $0x4] sm:$0xf]
        %v537 = vld [vmem:[%s3 + $0x8] sm:$0xf]
        %v538 = vld [vmem:[%s3 + $0xc] sm:$0xf]
        %v539 = vld [vmem:[%s3 + $0x10] sm:$0xf]
        %v540 = vld [vmem:[%s3 + $0x14] sm:$0xf]
        %v541 = vld [vmem:[%s3 + $0x18] sm:$0xf]
        %v542 = vld [vmem:[%s3 + $0x1c] sm:$0xf]
        %v543 = vld [vmem:[%s4] sm:$0x1]
        %v545 = vperm.slane %v543, 0
        %v555 = vunpack.c.l.b16 %v535
        %v556 = vunpack.c.l.b16 %v536
        %v557 = vunpack.c.l.b16 %v537
        %v558 = vunpack.c.l.b16 %v538
        %v559 = vunpack.c.l.b16 %v539
        %v560 = vunpack.c.l.b16 %v540
        %v561 = vunpack.c.l.b16 %v541
        %v562 = vunpack.c.l.b16 %v542
        %v563 = vpack.c.b16 %v556, %v555
        %v564 = vpack.c.b16 %v558, %v557
        %v565 = vpack.c.b16 %v560, %v559
        %v566 = vpack.c.b16 %v562, %v561
        %vm571 = vcmask 523264
        %v573 = vsel %vm571, %v532, 0
        %v576 = vsel %vm571, %v533, 0
        %v579 = vsel %vm571, %v534, 0
        %581 = vmatpush.bf16.msra.mxu0 0
        %582 = vmatpush.bf16.msra.mxu0 0
        %583 = vmatpush.bf16.msra.mxu0 0
        %584 = vmatpush.bf16.msra.mxu0 0
        %585 = vmatpush.bf16.msra.mxu0 %v566
        %586 = vmatpush.bf16.msra.mxu0 %v565
        %587 = vmatpush.bf16.msra.mxu0 %v564
        %588 = vmatpush.bf16.msra.mxu0 %v563
        %589 = vmatmul.bf16.gmra.mxu0 %v573
        %v590 = vpop.f32.mrf.mxu0
        %v591 = vadd.f32 %v545, %v590
        %v592 = vpop.f32.mrf.mxu0
        %v593 = vadd.f32 %v545, %v592
        %594 = vmatmul.bf16.gmra.mxu0 %v576
        %v595 = vpop.f32.mrf.mxu0
        %v596 = vadd.f32 %v545, %v595
        %v597 = vpop.f32.mrf.mxu0
        %v598 = vadd.f32 %v545, %v597
        %599 = vmatmul.bf16.gmra.mxu0 %v579
        %v600 = vpop.f32.mrf.mxu0
        %v601 = vadd.f32 %v545, %v600
        %v602 = vpop.f32.mrf.mxu0
        %v603 = vadd.f32 %v545, %v602
        %604 = vdwg.mxu0
        %vm605 = vcmp.gt.f32.partialorder %v591, 0.0
        %vm606 = vcmp.gt.f32.partialorder %v593, 0.0
        %vm607 = vcmp.gt.f32.partialorder %v596, 0.0
        %vm608 = vcmp.gt.f32.partialorder %v598, 0.0
        %vm609 = vcmp.gt.f32.partialorder %v601, 0.0
        %vm610 = vcmp.gt.f32.partialorder %v603, 0.0
        %v611 = vmul.f32 %v591, 0.01
        %v612 = vmul.f32 %v593, 0.01
        %v613 = vmul.f32 %v596, 0.01
        %v614 = vmul.f32 %v598, 0.01
        %v615 = vmul.f32 %v601, 0.01
        %v616 = vmul.f32 %v603, 0.01
        %v617 = vsel %vm605, %v591, %v611
        %v618 = vsel %vm606, %v593, %v612
        %v619 = vsel %vm607, %v596, %v613
        %v620 = vsel %vm608, %v598, %v614
        %v621 = vsel %vm609, %v601, %v615
        %v622 = vsel %vm610, %v603, %v616
        %v623 = vpack.c.bf16 %v618, %v617
        %v624 = vpack.c.bf16 %v620, %v619
        %v625 = vpack.c.bf16 %v622, %v621
        %v626 = vld [vmem:[%s5] sm:$0xf]
        %v627 = vld [vmem:[%s5 + $0x4] sm:$0xf]
        %v628 = vld [vmem:[%s6] sm:$0x1]
        %v630 = vperm.slane %v628, 0
        %v634 = vunpack.c.l.b16 %v626
        %v635 = vunpack.c.l.b16 %v627
        %v636 = vpack.c.b16 %v635, %v634
        %vm638 = vcmask 130048
        %v640 = vsel %vm638, %v623, 0
        %v643 = vsel %vm638, %v624, 0
        %v646 = vsel %vm638, %v625, 0
        %648 = vmatpush.bf16.msra.mxu0 0
        %649 = vmatpush.bf16.msra.mxu0 0
        %650 = vmatpush.bf16.msra.mxu0 0
        %651 = vmatpush.bf16.msra.mxu0 0
        %652 = vmatpush.bf16.msra.mxu0 0
        %653 = vmatpush.bf16.msra.mxu0 0
        %654 = vmatpush.bf16.msra.mxu0 0
        %655 = vmatpush.bf16.msra.mxu0 %v636
        %656 = vmatmul.bf16.gmra.mxu0 %v640
        %v657 = vpop.f32.mrf.mxu0
        %v658 = vadd.f32 %v630, %v657
        %v659 = vpop.f32.mrf.mxu0
        %v660 = vadd.f32 %v630, %v659
        %661 = vmatmul.bf16.gmra.mxu0 %v643
        %v662 = vpop.f32.mrf.mxu0
        %v663 = vadd.f32 %v630, %v662
        %v664 = vpop.f32.mrf.mxu0
        %v665 = vadd.f32 %v630, %v664
        %666 = vmatmul.bf16.gmra.mxu0 %v646
        %v667 = vpop.f32.mrf.mxu0
        %v668 = vadd.f32 %v630, %v667
        %v669 = vpop.f32.mrf.mxu0
        %v670 = vadd.f32 %v630, %v669
        %671 = vdwg.mxu0
        %v672 = vmul.f32 %v658, 0.5
        %v673 = vmul.f32 %v660, 0.5
        %v674 = vmul.f32 %v663, 0.5
        %v675 = vmul.f32 %v665, 0.5
        %v676 = vmul.f32 %v668, 0.5
        %v677 = vmul.f32 %v670, 0.5
        %v678 = vtanh.pop %v672
        %v679 = vtanh.pop %v673
        %v680 = vtanh.pop %v674
        %v681 = vtanh.pop %v675
        %v682 = vtanh.pop %v676
        %v683 = vtanh.pop %v677
        %v684 = vadd.f32 %v678, 1.0
        %v685 = vadd.f32 %v679, 1.0
        %v686 = vadd.f32 %v680, 1.0
        %v687 = vadd.f32 %v681, 1.0
        %v688 = vadd.f32 %v682, 1.0
        %v689 = vadd.f32 %v683, 1.0
        %v690 = vmul.f32 %v684, 0.5
        %v691 = vmul.f32 %v685, 0.5
        %v692 = vmul.f32 %v686, 0.5
        %v693 = vmul.f32 %v687, 0.5
        %v694 = vmul.f32 %v688, 0.5
        %v695 = vmul.f32 %v689, 0.5
        %v696 = vpack.c.bf16 %v690, %v690
        %v697 = vpack.c.bf16 %v691, %v691
        %v698 = vpack.c.bf16 %v692, %v692
        %v699 = vpack.c.bf16 %v693, %v693
        %v700 = vpack.c.bf16 %v694, %v694
        %v701 = vpack.c.bf16 %v695, %v695
        %vm702 = vcmask 68608
        %703 = vst.msk [vmem:[%s303] sm:$0xf] %vm702, %v696
        %704 = vst.msk [vmem:[%s303 + $0x4] sm:$0xf] %vm702, %v697
        %705 = vst.msk [vmem:[%s303 + $0x8] sm:$0xf] %vm702, %v698
        %706 = vst.msk [vmem:[%s303 + $0xc] sm:$0xf] %vm702, %v699
        %707 = vst.msk [vmem:[%s303 + $0x10] sm:$0xf] %vm702, %v700
        %708 = vst.msk [vmem:[%s303 + $0x14] sm:$0xf] %vm702, %v701
        %s709 = sand.u32 %s181, 1
        %s710 = sand.u32 %s181, 1
        %s711 = smul.addr %s710, 24
        %s712 = scalar_lea.vmem [#allocation4], %s711
        // Predicated region
        $region53: #{tpu_custom_call.1} parent=47 // pred_check
          %p713 = pneg %p191
        $region54: #{tpu_custom_call.1} parent=47 // pred_check_branch
          %715 = sbr.rel (%p713) target = $region56
        $region55: #{tpu_custom_call.1} parent=47 // pred_region
          %s716 = smul.u32 6, %s21
          %s717 = ssub.s32 25, %s716
          %p718 = scmp.lt.s32.totalorder %s717, 6
          %s719 = scalar_select %p718, %s717, 6
          %s720 = smul.u32 4, %s719
          %p721 = scmp.ne.s32.totalorder 0, %s720
          %s722 = smul.addr %s716, 4
          %s723 = scalar_lea.vmem %s7, %s722
          // Predicated region
          $region57: #{tpu_custom_call.1} parent=55 // pred_check
            %p724 = pneg %p721
          $region58: #{tpu_custom_call.1} parent=55 // pred_check_branch
            %726 = sbr.rel (%p724) target = $region60
          $region59: #{tpu_custom_call.1} parent=55 // pred_region
            // Predicated region
            $region61: #{tpu_custom_call.1} parent=59 // pred_check
              _
            $region62: #{tpu_custom_call.1} parent=59 // pred_check_branch
              %728 = sbr.rel target = $region64
            $region63: #{tpu_custom_call.1} parent=59 // pred_region
              // Predicated region
              $region83: #{tpu_custom_call.1} parent=63 // pred_check
                _
              $region84: #{tpu_custom_call.1} parent=63 // pred_check_branch
                %789 = sbr.rel (0) target = $region86
              $region85: #{tpu_custom_call.1} parent=63 // pred_region
                %s791 = ssub.s32 16, 1
                %s792 = sdiv.u32.pop %s719, 6
                %s793 = srem.u32.pop %s719, 6
                // While loop
                $region87: #{tpu_custom_call.1} parent=85 // loop_pre_header
                  _
                $region88: #{tpu_custom_call.1} parent=85 // loop_header
                  %s795 = sphi 0, %s797
                  %p796 = scmp.ge.s32.totalorder %s795, %s792
                  %s800 = sphi 0, %s817
                  %s801 = sphi %s712, %s820
                  %s802 = sphi %s723, %s821
                $region89: #{tpu_custom_call.1} parent=85 // loop_header_branch
                  %799 = sbr.rel (%p796) target = $region93
                $region90: #{tpu_custom_call.1} parent=85 // loop_body
                  %v803 = vld [vmem:[%s801] sm:%s791]
                  %804 = vst [vmem:[%s802] sm:%s791] %v803
                  %v805 = vld [vmem:[%s801 + $0x4] sm:%s791]
                  %806 = vst [vmem:[%s802 + $0x4] sm:%s791] %v805
                  %v807 = vld [vmem:[%s801 + $0x8] sm:%s791]
                  %808 = vst [vmem:[%s802 + $0x8] sm:%s791] %v807
                  %v809 = vld [vmem:[%s801 + $0xc] sm:%s791]
                  %810 = vst [vmem:[%s802 + $0xc] sm:%s791] %v809
                  %v811 = vld [vmem:[%s801 + $0x10] sm:%s791]
                  %812 = vst [vmem:[%s802 + $0x10] sm:%s791] %v811
                  %v813 = vld [vmem:[%s801 + $0x14] sm:%s791]
                  %814 = vst [vmem:[%s802 + $0x14] sm:%s791] %v813
                  %s815 = sadd.s32 1, %s800
                  %p816 = scmp.ge.s32.totalorder %s815, %s792
                  %s817 = scalar_select %p816, 0, %s815
                  %s818 = smul.u32 %s817, 24
                  %s819 = smul.u32 %s817, 24
                  %s820 = scalar_lea.vmem %s712, %s818 [#allocation4]
                  %s821 = scalar_lea.vmem %s723, %s819
                $region91: #{tpu_custom_call.1} parent=85 // loop_footer
                  %s797 = sadd.s32 %s795, 1
                $region92: #{tpu_custom_call.1} parent=85 // loop_footer_branch
                  %794 = sbr.rel target = $region88
                $region93: #{tpu_custom_call.1} parent=85 // loop_exit
                  _
                %s822 = sdiv.u32.pop %s719, 6
                %s823 = srem.u32.pop %s719, 6
                %s824 = smul.u32 %s822, 6
                %s825 = smul.u32 4, %s824
                %s826 = scalar_lea.vmem %s712, %s825 [#allocation4]
                %s827 = smul.u32 4, %s824
                %s828 = scalar_lea.vmem %s723, %s827
                // While loop
                $region94: #{tpu_custom_call.1} parent=85 // loop_pre_header
                  _
                $region95: #{tpu_custom_call.1} parent=85 // loop_header
                  %s830 = sphi 0, %s832
                  %p831 = scmp.ge.s32.totalorder %s830, %s823
                  %s835 = sphi 0, %s842
                  %s836 = sphi %s826, %s845
                  %s837 = sphi %s828, %s846
                $region96: #{tpu_custom_call.1} parent=85 // loop_header_branch
                  %834 = sbr.rel (%p831) target = $region100
                $region97: #{tpu_custom_call.1} parent=85 // loop_body
                  %v838 = vld [vmem:[%s836] sm:%s791]
                  %839 = vst [vmem:[%s837] sm:%s791] %v838
                  %s840 = sadd.s32 1, %s835
                  %p841 = scmp.ge.s32.totalorder %s840, %s823
                  %s842 = scalar_select %p841, 0, %s840
                  %s843 = smul.u32 %s842, 4
                  %s844 = smul.u32 %s842, 4
                  %s845 = scalar_lea.vmem %s826, %s843 [#allocation4]
                  %s846 = scalar_lea.vmem %s828, %s844
                $region98: #{tpu_custom_call.1} parent=85 // loop_footer
                  %s832 = sadd.s32 %s830, 1
                $region99: #{tpu_custom_call.1} parent=85 // loop_footer_branch
                  %829 = sbr.rel target = $region95
                $region100: #{tpu_custom_call.1} parent=85 // loop_exit
                  _
              $region86: #{tpu_custom_call.1} parent=63 // pred_fallthru
                _
            $region64: #{tpu_custom_call.1} parent=59 // pred_fallthru
              _
            // Predicated region
            $region65: #{tpu_custom_call.1} parent=59 // pred_check
              _
            $region66: #{tpu_custom_call.1} parent=59 // pred_check_branch
              %730 = sbr.rel (0) target = $region68
            $region67: #{tpu_custom_call.1} parent=59 // pred_region
              %s732 = ssub.s32 16, 1
              %s733 = sdiv.u32.pop %s719, 6
              %s734 = srem.u32.pop %s719, 6
              // While loop
              $region69: #{tpu_custom_call.1} parent=67 // loop_pre_header
                _
              $region70: #{tpu_custom_call.1} parent=67 // loop_header
                %s736 = sphi 0, %s738
                %p737 = scmp.ge.s32.totalorder %s736, %s733
                %s741 = sphi 0, %s758
                %s742 = sphi %s712, %s761
                %s743 = sphi %s723, %s762
              $region71: #{tpu_custom_call.1} parent=67 // loop_header_branch
                %740 = sbr.rel (%p737) target = $region75
              $region72: #{tpu_custom_call.1} parent=67 // loop_body
                %v744 = vld [vmem:[%s742] sm:%s732]
                %745 = vst [vmem:[%s743] sm:%s732] %v744
                %v746 = vld [vmem:[%s742 + $0x4] sm:%s732]
                %747 = vst [vmem:[%s743 + $0x4] sm:%s732] %v746
                %v748 = vld [vmem:[%s742 + $0x8] sm:%s732]
                %749 = vst [vmem:[%s743 + $0x8] sm:%s732] %v748
                %v750 = vld [vmem:[%s742 + $0xc] sm:%s732]
                %751 = vst [vmem:[%s743 + $0xc] sm:%s732] %v750
                %v752 = vld [vmem:[%s742 + $0x10] sm:%s732]
                %753 = vst [vmem:[%s743 + $0x10] sm:%s732] %v752
                %v754 = vld [vmem:[%s742 + $0x14] sm:%s732]
                %755 = vst [vmem:[%s743 + $0x14] sm:%s732] %v754
                %s756 = sadd.s32 1, %s741
                %p757 = scmp.ge.s32.totalorder %s756, %s733
                %s758 = scalar_select %p757, 0, %s756
                %s759 = smul.u32 %s758, 24
                %s760 = smul.u32 %s758, 24
                %s761 = scalar_lea.vmem %s712, %s759 [#allocation4]
                %s762 = scalar_lea.vmem %s723, %s760
              $region73: #{tpu_custom_call.1} parent=67 // loop_footer
                %s738 = sadd.s32 %s736, 1
              $region74: #{tpu_custom_call.1} parent=67 // loop_footer_branch
                %735 = sbr.rel target = $region70
              $region75: #{tpu_custom_call.1} parent=67 // loop_exit
                _
              %s763 = sdiv.u32.pop %s719, 6
              %s764 = srem.u32.pop %s719, 6
              %s765 = smul.u32 %s763, 6
              %s766 = smul.u32 4, %s765
              %s767 = scalar_lea.vmem %s712, %s766 [#allocation4]
              %s768 = smul.u32 4, %s765
              %s769 = scalar_lea.vmem %s723, %s768
              // While loop
              $region76: #{tpu_custom_call.1} parent=67 // loop_pre_header
                _
              $region77: #{tpu_custom_call.1} parent=67 // loop_header
                %s771 = sphi 0, %s773
                %p772 = scmp.ge.s32.totalorder %s771, %s764
                %s776 = sphi 0, %s783
                %s777 = sphi %s767, %s786
                %s778 = sphi %s769, %s787
              $region78: #{tpu_custom_call.1} parent=67 // loop_header_branch
                %775 = sbr.rel (%p772) target = $region82
              $region79: #{tpu_custom_call.1} parent=67 // loop_body
                %v779 = vld [vmem:[%s777] sm:%s732]
                %780 = vst [vmem:[%s778] sm:%s732] %v779
                %s781 = sadd.s32 1, %s776
                %p782 = scmp.ge.s32.totalorder %s781, %s764
                %s783 = scalar_select %p782, 0, %s781
                %s784 = smul.u32 %s783, 4
                %s785 = smul.u32 %s783, 4
                %s786 = scalar_lea.vmem %s767, %s784 [#allocation4]
                %s787 = scalar_lea.vmem %s769, %s785
              $region80: #{tpu_custom_call.1} parent=67 // loop_footer
                %s773 = sadd.s32 %s771, 1
              $region81: #{tpu_custom_call.1} parent=67 // loop_footer_branch
                %770 = sbr.rel target = $region77
              $region82: #{tpu_custom_call.1} parent=67 // loop_exit
                _
            $region68: #{tpu_custom_call.1} parent=59 // pred_fallthru
              _
          $region60: #{tpu_custom_call.1} parent=55 // pred_fallthru
            _
          %847 = vnop
        $region56: #{tpu_custom_call.1} parent=47 // pred_fallthru
          _
      $region48: #{tpu_custom_call.1} parent=5 // pred_fallthru
        _
      %p848 = scmp.le.s32.totalorder 2, %s16
      // Predicated region
      $region101: #{tpu_custom_call.1} parent=5 // pred_check
        %p849 = pneg %p848
      $region102: #{tpu_custom_call.1} parent=5 // pred_check_branch
        %851 = sbr.rel (%p849) target = $region104
      $region103: #{tpu_custom_call.1} parent=5 // pred_region
        %s852 = ssub.s32 %s16, 2
        // Predicated region
        $region105: #{tpu_custom_call.1} parent=103 // pred_check
          %p853 = pneg %p197
        $region106: #{tpu_custom_call.1} parent=103 // pred_check_branch
          %855 = sbr.rel (%p853) target = $region108
        $region107: #{tpu_custom_call.1} parent=103 // pred_region
          %s856 = sand.u32 %s182, 1
          %s857 = sand.u32 %s182, 1
          %s858 = smul.addr %s857, 24
          %s859 = scalar_lea.vmem [#allocation4], %s858
        $region108: #{tpu_custom_call.1} parent=103 // pred_fallthru
          _
      $region104: #{tpu_custom_call.1} parent=5 // pred_fallthru
        _
    $region6: #{tpu_custom_call.1} parent=1 // loop_footer
      %s20 = sadd.s32 1, %s16
    $region7: #{tpu_custom_call.1} parent=1 // loop_footer_branch
      %15 = sbr.rel target = $region3
    $region8: #{tpu_custom_call.1} parent=1 // loop_exit
      _
    %860 = vsyncpa [#allocation3], 1
    %s861 = scalar_lea.sflag [#allocation3], 1
    %862 = vsyncpa %s861, 1

</llo_original>
